<compile_context>
chip_gen: v7x
topology: tpu7x:2x2x1
jax: 0.10.0
libtpu: 0.0.40
codegen_flags: <defaults>
</compile_context>

<pallas_src>
import jax
import jax.numpy as jnp
import numpy as np
from jax import lax
from jax.experimental import pallas as pl
from jax.experimental.pallas import tpu as pltpu


def _round_up(a, b):
    return -(-a // b) * b


def _tensorcores_per_chip():
    """2 on v7x (two TensorCores per chip), else 1."""
    try:
        kind = jax.devices()[0].device_kind.lower().replace(" ", "")
        if "v7" in kind or "tpu7" in kind:
            return 2
    except Exception:
        pass
    return 1


def _make_spatial_attention_kernel(nb, hwp, shifts):
    """Kernel for a KxK spatial-attention conv on flattened (lane-padded) maps.

    shifts: tuple of flat-index offsets, one per tap, in weight-plane order.
    """

    def kernel(w_ref, x_ref, o_ref):
        # w_ref: VMEM f32 (taps, 2*nb, hwp)  masked per-tap weight planes (resident;
        #        first nb sublanes = avg taps with 1/C folded in, next nb = max taps)
        # x_ref: VMEM (nb, C, hwp)           input block (spatial dims flattened)
        # o_ref: VMEM (nb, hwp)              sigmoid attention map
        x = x_ref[...]
        s = jnp.sum(x, axis=1, dtype=jnp.float32)        # (nb, hwp); 1/C lives in w
        m = jnp.max(x, axis=1).astype(jnp.float32)       # (nb, hwp)
        z = jnp.concatenate([s, m], axis=0)              # (2*nb, hwp)

        # Fully unrolled tap loop: 1 roll + 1 mul + 1 add per tap (both conv input
        # channels handled at once via the sublane stacking).  Two accumulators
        # break the serial add dependency chain.
        acc = [None, None]
        for t, shift in enumerate(shifts):
            if shift == 0:
                contrib = w_ref[t] * z
            else:
                amt = (-shift) % hwp                     # rolled[p] == z[p + shift]
                contrib = w_ref[t] * pltpu.roll(z, shift=amt, axis=1)
            i = t & 1
            acc[i] = contrib if acc[i] is None else acc[i] + contrib
        total = acc[0] if acc[1] is None else acc[0] + acc[1]

        y = jax.nn.sigmoid(total[:nb] + total[nb:])      # (nb, hwp)
        o_ref[...] = y.astype(o_ref.dtype)

    return kernel


def spatial_attention(x, weight):
    """x: (N, C, H, W), weight: (1, 2, K, K), K odd -> (N, 1, H, W)."""
    N, C, H, W = x.shape
    K = weight.shape[-1]
    assert weight.shape == (1, 2, K, K) and K % 2 == 1
    pad = K // 2
    taps = K * K
    HW = H * W
    HWp = _round_up(HW, 128)               # lane-dense last dim (unmasked vst)

    # ---- batch-block sizing -------------------------------------------------
    itemsize = jnp.dtype(x.dtype).itemsize
    # Real per-image VMEM working set: double-buffered input block + f32
    # intermediates (z, acc, rolled temp ~ 6 rows) + resident weight planes.
    per_img = 2 * C * HWp * itemsize + (6 + 2 * taps) * HWp * 4
    nb = max(1, (4 << 20) // max(per_img, 1))     # ~4 MiB working set per step
    ncores = _tensorcores_per_chip()
    if nb >= N:
        nb = N                                    # one full-batch block; no forced
                                                  # split on single-TC v5e/v6e
        if ncores > 1 and N >= 16:                # v7x: one aligned block per TC
            nb = _round_up(-(-N // ncores), 8)
    if nb < N:
        nb = max(8, nb - nb % 8)                  # sublane-align multi-block grids
        steps = -(-N // nb)
        if ncores > 1:
            steps = _round_up(steps, ncores)      # balanced grid across TensorCores
        nb = max(8, _round_up(-(-N // steps), 8))
        nb = min(nb, _round_up(N, 8))
    Np = _round_up(N, nb)                         # pad batch instead of shrinking nb
    steps = Np // nb

    # ---- precomputed masked-weight planes (stacked avg/max layout) ----------
    w = weight.astype(jnp.float32)
    pos = jnp.arange(HWp, dtype=jnp.int32)
    row = pos // W
    col = pos % W
    in_image = pos < HW                           # zero the lane-padding tail
    planes = []
    shifts = []
    for dy in range(-pad, pad + 1):
        for dx in range(-pad, pad + 1):
            ok = (in_image
                  & (row + dy >= 0) & (row + dy < H)
                  & (col + dx >= 0) & (col + dx < W)).astype(jnp.float32)  # (HWp,)
            wa = w[0, 0, dy + pad, dx + pad] / C  # fold the 1/C mean factor
            wm = w[0, 1, dy + pad, dx + pad]
            plane = jnp.concatenate(
                [jnp.broadcast_to(ok * wa, (nb, HWp)),
                 jnp.broadcast_to(ok * wm, (nb, HWp))], axis=0)            # (2*nb, HWp)
            planes.append(plane)
            shifts.append(dy * W + dx)
    w_planes = jnp.stack(planes, axis=0)          # (taps, 2*nb, HWp) f32

    # ---- lane-dense, batch-padded input ------------------------------------
    x_flat = x.reshape(N, C, HW)
    if Np != N or HWp != HW:
        x_flat = jnp.pad(x_flat, ((0, Np - N), (0, 0), (0, HWp - HW)))

    kernel = _make_spatial_attention_kernel(nb, HWp, tuple(shifts))
    out = pl.pallas_call(
        kernel,
        out_shape=jax.ShapeDtypeStruct((Np, HWp), x.dtype),
        grid=(steps,),
        in_specs=[
            pl.BlockSpec((taps, 2 * nb, HWp), lambda n: (0, 0, 0)),  # resident planes
            pl.BlockSpec((nb, C, HWp), lambda n: (n, 0, 0)),         # x block
        ],
        out_specs=pl.BlockSpec((nb, HWp), lambda n: (n, 0)),
        compiler_params=pltpu.CompilerParams(
            dimension_semantics=("parallel",),
            vmem_limit_bytes=32 * 1024 * 1024,
        ),
    )(w_planes, x_flat)
    # TODO(synk): for very large C*H*W (approaching the scoped-VMEM budget) the
    # channel axis would additionally be tiled in the grid with running sum/max
    # scratch; unnecessary at these sizes.
    return out[:N, :HW].reshape(N, 1, H, W)


def _reference(x, weight):
    """Pure-JAX reference matching the PyTorch forward."""
    avg = jnp.mean(x, axis=1, keepdims=True)
    mx = jnp.max(x, axis=1, keepdims=True)
    cat = jnp.concatenate([avg, mx], axis=1)                  # (N, 2, H, W)
    p = weight.shape[-1] // 2
    y = lax.conv_general_dilated(
        cat, weight, window_strides=(1, 1), padding=((p, p), (p, p)),
        dimension_numbers=("NCHW", "OIHW", "NCHW"))
    return jax.nn.sigmoid(y)


if __name__ == "__main__":
    key = jax.random.PRNGKey(0)
    kx, kw = jax.random.split(key)

    N, C, H, W = 2, 4, 16, 16
    x = jax.random.normal(kx, (N, C, H, W), dtype=jnp.float32)
    # Deterministic synthetic conv1 weight: Conv2d(2, 1, 3, padding=1, bias=False)
    weight = jax.random.normal(kw, (1, 2, 3, 3), dtype=jnp.float32) * 0.1

    out = spatial_attention(x, weight)
    out = jax.block_until_ready(out)

    ref = _reference(x, weight)
    assert out.shape == (N, 1, H, W)
    np.testing.assert_allclose(np.asarray(out), np.asarray(ref), rtol=1e-5, atol=1e-5)

    print("KERNEL_OK")
</pallas_src>

<mosaic_0001>
module attributes {stable_mosaic.version = 11 : i64} {
  func.func @kernel(%arg0: i32, %arg1: memref<9x4x256xf32, #tpu.memory_space<vmem>>, %arg2: memref<2x4x256xf32, #tpu.memory_space<vmem>>, %arg3: memref<2x256xf32, #tpu.memory_space<vmem>>) attributes {dimension_semantics = [#tpu.dimension_semantics<parallel>], iteration_bounds = array<i64: 1>, scalar_prefetch = 0 : i64, scratch_operands = 0 : i64, tpu.core_type = #tpu.core_type<tc>, window_params = [{pipeline_mode = #tpu.pipeline_mode<synchronous>, transform_indices = @transform_0, window_bounds = array<i64: 9, 4, 256>}, {transform_indices = @transform_1, window_bounds = array<i64: 2, 4, 256>}, {transform_indices = @transform_2, window_bounds = array<i64: 2, 256>}]} {
    %c0 = arith.constant 0 : index
    %c0_0 = arith.constant 0 : index
    %c0_1 = arith.constant 0 : index
    %0 = vector.load %arg2[%c0, %c0_0, %c0_1] : memref<2x4x256xf32, #tpu.memory_space<vmem>>, vector<2x4x256xf32>
    %cst = arith.constant dense<0.000000e+00> : vector<2x256xf32>
    %1 = vector.multi_reduction <add>, %0, %cst [1] : vector<2x4x256xf32> to vector<2x256xf32>
    %cst_2 = arith.constant dense<0xFF800000> : vector<2x256xf32>
    %2 = vector.multi_reduction <maximumf>, %0, %cst_2 [1] : vector<2x4x256xf32> to vector<2x256xf32>
    %3 = tpu.concatenate %1, %2 in 0 : vector<2x256xf32>, vector<2x256xf32> -> vector<4x256xf32>
    %c0_3 = arith.constant 0 : index
    %c0_4 = arith.constant 0 : index
    %c0_5 = arith.constant 0 : index
    %4 = vector.load %arg1[%c0_3, %c0_4, %c0_5] : memref<9x4x256xf32, #tpu.memory_space<vmem>>, vector<1x4x256xf32>
    %5 = vector.shape_cast %4 : vector<1x4x256xf32> to vector<4x256xf32>
    %c17_i32 = arith.constant 17 : i32
    %6 = tpu.dynamic_rotate %3 by %c17_i32 dim 1 : vector<4x256xf32>, i32 -> vector<4x256xf32>
    %7 = arith.mulf %5, %6 : vector<4x256xf32>
    %c1 = arith.constant 1 : index
    %c0_6 = arith.constant 0 : index
    %c0_7 = arith.constant 0 : index
    %8 = vector.load %arg1[%c1, %c0_6, %c0_7] : memref<9x4x256xf32, #tpu.memory_space<vmem>>, vector<1x4x256xf32>
    %9 = vector.shape_cast %8 : vector<1x4x256xf32> to vector<4x256xf32>
    %c16_i32 = arith.constant 16 : i32
    %10 = tpu.dynamic_rotate %3 by %c16_i32 dim 1 : vector<4x256xf32>, i32 -> vector<4x256xf32>
    %11 = arith.mulf %9, %10 : vector<4x256xf32>
    %c2 = arith.constant 2 : index
    %c0_8 = arith.constant 0 : index
    %c0_9 = arith.constant 0 : index
    %12 = vector.load %arg1[%c2, %c0_8, %c0_9] : memref<9x4x256xf32, #tpu.memory_space<vmem>>, vector<1x4x256xf32>
    %13 = vector.shape_cast %12 : vector<1x4x256xf32> to vector<4x256xf32>
    %c15_i32 = arith.constant 15 : i32
    %14 = tpu.dynamic_rotate %3 by %c15_i32 dim 1 : vector<4x256xf32>, i32 -> vector<4x256xf32>
    %15 = arith.mulf %13, %14 : vector<4x256xf32>
    %16 = arith.addf %7, %15 : vector<4x256xf32>
    %c3 = arith.constant 3 : index
    %c0_10 = arith.constant 0 : index
    %c0_11 = arith.constant 0 : index
    %17 = vector.load %arg1[%c3, %c0_10, %c0_11] : memref<9x4x256xf32, #tpu.memory_space<vmem>>, vector<1x4x256xf32>
    %18 = vector.shape_cast %17 : vector<1x4x256xf32> to vector<4x256xf32>
    %c1_i32 = arith.constant 1 : i32
    %19 = tpu.dynamic_rotate %3 by %c1_i32 dim 1 : vector<4x256xf32>, i32 -> vector<4x256xf32>
    %20 = arith.mulf %18, %19 : vector<4x256xf32>
    %21 = arith.addf %11, %20 : vector<4x256xf32>
    %c4 = arith.constant 4 : index
    %c0_12 = arith.constant 0 : index
    %c0_13 = arith.constant 0 : index
    %22 = vector.load %arg1[%c4, %c0_12, %c0_13] : memref<9x4x256xf32, #tpu.memory_space<vmem>>, vector<1x4x256xf32>
    %23 = vector.shape_cast %22 : vector<1x4x256xf32> to vector<4x256xf32>
    %24 = arith.mulf %23, %3 : vector<4x256xf32>
    %25 = arith.addf %16, %24 : vector<4x256xf32>
    %c5 = arith.constant 5 : index
    %c0_14 = arith.constant 0 : index
    %c0_15 = arith.constant 0 : index
    %26 = vector.load %arg1[%c5, %c0_14, %c0_15] : memref<9x4x256xf32, #tpu.memory_space<vmem>>, vector<1x4x256xf32>
    %27 = vector.shape_cast %26 : vector<1x4x256xf32> to vector<4x256xf32>
    %c255_i32 = arith.constant 255 : i32
    %28 = tpu.dynamic_rotate %3 by %c255_i32 dim 1 : vector<4x256xf32>, i32 -> vector<4x256xf32>
    %29 = arith.mulf %27, %28 : vector<4x256xf32>
    %30 = arith.addf %21, %29 : vector<4x256xf32>
    %c6 = arith.constant 6 : index
    %c0_16 = arith.constant 0 : index
    %c0_17 = arith.constant 0 : index
    %31 = vector.load %arg1[%c6, %c0_16, %c0_17] : memref<9x4x256xf32, #tpu.memory_space<vmem>>, vector<1x4x256xf32>
    %32 = vector.shape_cast %31 : vector<1x4x256xf32> to vector<4x256xf32>
    %c241_i32 = arith.constant 241 : i32
    %33 = tpu.dynamic_rotate %3 by %c241_i32 dim 1 : vector<4x256xf32>, i32 -> vector<4x256xf32>
    %34 = arith.mulf %32, %33 : vector<4x256xf32>
    %35 = arith.addf %25, %34 : vector<4x256xf32>
    %c7 = arith.constant 7 : index
    %c0_18 = arith.constant 0 : index
    %c0_19 = arith.constant 0 : index
    %36 = vector.load %arg1[%c7, %c0_18, %c0_19] : memref<9x4x256xf32, #tpu.memory_space<vmem>>, vector<1x4x256xf32>
    %37 = vector.shape_cast %36 : vector<1x4x256xf32> to vector<4x256xf32>
    %c240_i32 = arith.constant 240 : i32
    %38 = tpu.dynamic_rotate %3 by %c240_i32 dim 1 : vector<4x256xf32>, i32 -> vector<4x256xf32>
    %39 = arith.mulf %37, %38 : vector<4x256xf32>
    %40 = arith.addf %30, %39 : vector<4x256xf32>
    %c8 = arith.constant 8 : index
    %c0_20 = arith.constant 0 : index
    %c0_21 = arith.constant 0 : index
    %41 = vector.load %arg1[%c8, %c0_20, %c0_21] : memref<9x4x256xf32, #tpu.memory_space<vmem>>, vector<1x4x256xf32>
    %42 = vector.shape_cast %41 : vector<1x4x256xf32> to vector<4x256xf32>
    %c239_i32 = arith.constant 239 : i32
    %43 = tpu.dynamic_rotate %3 by %c239_i32 dim 1 : vector<4x256xf32>, i32 -> vector<4x256xf32>
    %44 = arith.mulf %42, %43 : vector<4x256xf32>
    %45 = arith.addf %35, %44 : vector<4x256xf32>
    %46 = arith.addf %45, %40 : vector<4x256xf32>
    %47 = vector.extract_strided_slice %46 {offsets = [0, 0], sizes = [2, 256], strides = [1, 1]} : vector<4x256xf32> to vector<2x256xf32>
    %48 = vector.extract_strided_slice %46 {offsets = [2, 0], sizes = [2, 256], strides = [1, 1]} : vector<4x256xf32> to vector<2x256xf32>
    %49 = arith.addf %47, %48 : vector<2x256xf32>
    %50 = arith.negf %49 : vector<2x256xf32>
    %51 = math.exp %50 : vector<2x256xf32>
    %cst_22 = arith.constant 1.000000e+00 : f32
    %52 = vector.broadcast %cst_22 : f32 to vector<2x256xf32>
    %53 = arith.addf %52, %51 : vector<2x256xf32>
    %54 = arith.divf %52, %53 : vector<2x256xf32>
    %c0_23 = arith.constant 0 : index
    %c0_24 = arith.constant 0 : index
    %55 = vector.load %arg3[%c0_23, %c0_24] : memref<2x256xf32, #tpu.memory_space<vmem>>, vector<2x256xf32>
    tpu.vector_store %arg3[%c0_23, %c0_24], %54 {strides = array<i32>} : memref<2x256xf32, #tpu.memory_space<vmem>>, vector<2x256xf32>,
    return
  }
  func.func @transform_0(%arg0: i32) -> (i32, i32, i32) {
    %c0_i32 = arith.constant 0 : i32
    %c0_i32_0 = arith.constant 0 : i32
    %c0_i32_1 = arith.constant 0 : i32
    %c0_i32_2 = arith.constant 0 : i32
    return %c0_i32, %c0_i32_0, %c0_i32_1 : i32, i32, i32
  }
  func.func @transform_1(%arg0: i32) -> (i32, i32, i32) {
    %c0_i32 = arith.constant 0 : i32
    %c0_i32_0 = arith.constant 0 : i32
    %c0_i32_1 = arith.constant 0 : i32
    return %arg0, %c0_i32, %c0_i32_0 : i32, i32, i32
  }
  func.func @transform_2(%arg0: i32) -> (i32, i32) {
    %c0_i32 = arith.constant 0 : i32
    %c0_i32_0 = arith.constant 0 : i32
    return %arg0, %c0_i32 : i32, i32
  }
}

</mosaic_0001>

<llo_original>
// kernel: tpu_custom_call.1
$region0: #{tpu_custom_call.1}
  #allocation0 [shape = 'u32[]', space=smem, size = 0x4, offset = 0x4, fixed_abs, tag = 'smem constant byte address 0x4 - core index']
  #allocation1 [shape = 'u32[144,128]{1,0:T(1,128)}', space=vmem, size = 0x12000, scoped, tag = 'internal scratch']
  %s0 = inlined_call_operand.hbm [shape: f32[9,4,256], index: 0, kind: input, shape index: {}]
  %s1 = inlined_call_operand.hbm [shape: f32[2,4,256], index: 1, kind: input, shape index: {}]
  %s2 = inlined_call_operand.hbm [shape: f32[2,256], index: 2, kind: output, shape index: {}]
  %s3 = sld [smem:[#allocation0]]
  $region26: #{tpu_custom_call.1} parent=0
    _
  %s5 = ssub.s32 1, %s3
  %s6 = scalar_select 0, %s5, %s3
  $region1: #{tpu_custom_call.1} parent=0
    #allocation2 [shape = 'u8[36864]{0}', space=vmem, size = 0x9000, scoped, tag = 'input window, operand 0, single buffered']
    #allocation3 [shape = 's32[1]{0}', space=sflag, size = 0x4, scoped, tag = 'scoped memory for tpu_custom_call.1']
    #allocation4 [shape = 's32[1]{0}', space=sflag, size = 0x4, scoped, tag = 'scoped memory for tpu_custom_call.1']
    #allocation5 [shape = 'u8[8192]{0}', space=vmem, size = 0x2000, scoped, tag = 'input window, operand 1, single buffered']
    #allocation6 [shape = 's32[1]{0}', space=sflag, size = 0x4, scoped, tag = 'scoped memory for tpu_custom_call.1']
    #allocation7 [shape = 'u8[2048]{0}', space=vmem, size = 0x800, scoped, tag = 'output window, operand 0, single buffered']
    %7 = vsyncpa [#allocation3], 0
    %8 = vsyncpa [#allocation6], 0
    %9 = vsyncpa [#allocation4], 0
    // Predicated region
    $region2: #{tpu_custom_call.1} parent=1 // pred_check
      _
    $region3: #{tpu_custom_call.1} parent=1 // pred_check_branch
      %11 = sbr.rel (0) target = $region5
    $region4: #{tpu_custom_call.1} parent=1 // pred_region
      %s13 = ssub.s32 1152, 1152
      %14 = vsyncadd [#allocation3], %s13
      %s15 = sshll.u32 [#allocation2], 4
      %s16 = int_to_ptr.vmem [resolvable:$true] %s15
      %21 = dma.hbm_to_vmem [thread:$0]  %s0, 1152, %s16, [#allocation3], 128, 128, 8
    $region5: #{tpu_custom_call.1} parent=1 // pred_fallthru
      _
    // Predicated region
    $region6: #{tpu_custom_call.1} parent=1 // pred_check
      _
    $region7: #{tpu_custom_call.1} parent=1 // pred_check_branch
      %23 = sbr.rel (0) target = $region9
    $region8: #{tpu_custom_call.1} parent=1 // pred_region
      %s25 = ssub.s32 256, 256
      %26 = vsyncadd [#allocation6], %s25
      %s27 = sshll.u32 [#allocation5], 4
      %s28 = int_to_ptr.vmem [resolvable:$true] %s27
      %33 = dma.hbm_to_vmem [thread:$0]  %s1, 256, %s28, [#allocation6], 128, 128, 8
    $region9: #{tpu_custom_call.1} parent=1 // pred_fallthru
      _
    // Predicated region
    $region10: #{tpu_custom_call.1} parent=1 // pred_check
      _
    $region11: #{tpu_custom_call.1} parent=1 // pred_check_branch
      %35 = sbr.rel (0) target = $region13
    $region12: #{tpu_custom_call.1} parent=1 // pred_region
      %36 = dma.done [#allocation3], 1152
    $region13: #{tpu_custom_call.1} parent=1 // pred_fallthru
      _
    // Predicated region
    $region14: #{tpu_custom_call.1} parent=1 // pred_check
      _
    $region15: #{tpu_custom_call.1} parent=1 // pred_check_branch
      %38 = sbr.rel (0) target = $region17
    $region16: #{tpu_custom_call.1} parent=1 // pred_region
      %39 = dma.done [#allocation6], 256
    $region17: #{tpu_custom_call.1} parent=1 // pred_fallthru
      _
    %v40 = vld [vmem:[#allocation5] sm:$0xff]
    %v41 = vld [vmem:[#allocation5 + $0x8] sm:$0xff]
    %v44 = vcombine.high %v40, %v40
    %v45 = vcombine.high %v41, %v41
    %vm48 = vcmask 1043456
    %v49 = vsel %vm48, %v40, 0.0
    %v50 = vrot.slane %v49, 4
    %v51 = vadd.f32 %v49, %v50
    %v52 = vrot.slane %v51, 2
    %v53 = vadd.f32 %v51, %v52
    %v54 = vrot.slane %v53, 1
    %v55 = vadd.f32 %v53, %v54
    %v56 = vsel %vm48, %v44, 0.0
    %v57 = vrot.slane %v56, 4
    %v58 = vadd.f32 %v56, %v57
    %v59 = vrot.slane %v58, 2
    %v60 = vadd.f32 %v58, %v59
    %v61 = vrot.slane %v60, 1
    %v62 = vadd.f32 %v60, %v61
    %v63 = vsel %vm48, %v41, 0.0
    %v64 = vrot.slane %v63, 4
    %v65 = vadd.f32 %v63, %v64
    %v66 = vrot.slane %v65, 2
    %v67 = vadd.f32 %v65, %v66
    %v68 = vrot.slane %v67, 1
    %v69 = vadd.f32 %v67, %v68
    %v70 = vsel %vm48, %v45, 0.0
    %v71 = vrot.slane %v70, 4
    %v72 = vadd.f32 %v70, %v71
    %v73 = vrot.slane %v72, 2
    %v74 = vadd.f32 %v72, %v73
    %v75 = vrot.slane %v74, 1
    %v76 = vadd.f32 %v74, %v75
    %v77 = vsel %vm48, %v40, -inf
    %v78 = vrot.slane %v77, 4
    %v79 = vmax.f32 %v77, %v78
    %v80 = vrot.slane %v79, 2
    %v81 = vmax.f32 %v79, %v80
    %v82 = vrot.slane %v81, 1
    %v83 = vmax.f32 %v81, %v82
    %v84 = vsel %vm48, %v44, -inf
    %v85 = vrot.slane %v84, 4
    %v86 = vmax.f32 %v84, %v85
    %v87 = vrot.slane %v86, 2
    %v88 = vmax.f32 %v86, %v87
    %v89 = vrot.slane %v88, 1
    %v90 = vmax.f32 %v88, %v89
    %v91 = vsel %vm48, %v41, -inf
    %v92 = vrot.slane %v91, 4
    %v93 = vmax.f32 %v91, %v92
    %v94 = vrot.slane %v93, 2
    %v95 = vmax.f32 %v93, %v94
    %v96 = vrot.slane %v95, 1
    %v97 = vmax.f32 %v95, %v96
    %v98 = vsel %vm48, %v45, -inf
    %v99 = vrot.slane %v98, 4
    %v100 = vmax.f32 %v98, %v99
    %v101 = vrot.slane %v100, 2
    %v102 = vmax.f32 %v100, %v101
    %v103 = vrot.slane %v102, 1
    %v104 = vmax.f32 %v102, %v103
    %vm109 = vcmask 1041409
    %v110 = vsel %vm109, %v69, %v55
    %v111 = vsel %vm109, %v76, %v62
    %vm118 = vcmask 1043459
    %v119 = vsel %vm118, %v97, %v83
    %v120 = vsel %vm118, %v104, %v90
    %vm123 = vcmask 1041408
    %v124 = vsel %vm123, %v110, %v119
    %v125 = vsel %vm123, %v111, %v120
    %v126 = vld [vmem:[#allocation2] sm:$0xff]
    %127 = vrot.lane.b32.xlu0 %v124, 17
    %v128 = vpop.permute.xlu0 %127
    %129 = vrot.lane.b32.xlu0 %v125, 17
    %v130 = vpop.permute.xlu0 %129
    %v131 = vlaneseq
    %v132 = vand.u32 %v131, 127
    %vm133 = vcmp.lt.s32.totalorder %v132, 17
    %v134 = vsel %vm133, %v128, %v130
    %v135 = vsel %vm133, %v130, %v128
    %v138 = vcombine.low %v135, %v134
    %v140 = vmul.f32 %v126, %v138
    %s141 = scalar_lea.vmem [#allocation2], 8
    %v142 = vld [vmem:[%s141] sm:$0xff]
    %143 = vrot.lane.b32.xlu0 %v124, 16
    %v144 = vpop.permute.xlu0 %143
    %145 = vrot.lane.b32.xlu0 %v125, 16
    %v146 = vpop.permute.xlu0 %145
    %vm147 = vcmp.lt.s32.totalorder %v132, 16
    %v148 = vsel %vm147, %v144, %v146
    %v149 = vsel %vm147, %v146, %v144
    %v152 = vcombine.low %v149, %v148
    %v154 = vmul.f32 %v142, %v152
    %s155 = scalar_lea.vmem [#allocation2], 16
    %v156 = vld [vmem:[%s155] sm:$0xff]
    %157 = vrot.lane.b32.xlu0 %v124, 15
    %v158 = vpop.permute.xlu0 %157
    %159 = vrot.lane.b32.xlu0 %v125, 15
    %v160 = vpop.permute.xlu0 %159
    %vm161 = vcmp.lt.s32.totalorder %v132, 15
    %v162 = vsel %vm161, %v158, %v160
    %v163 = vsel %vm161, %v160, %v158
    %v166 = vcombine.low %v163, %v162
    %v168 = vmul.f32 %v156, %v166
    %v169 = vadd.f32 %v140, %v168
    %s170 = scalar_lea.vmem [#allocation2], 24
    %v171 = vld [vmem:[%s170] sm:$0xff]
    %172 = vrot.lane.b32.xlu0 %v124, 1
    %v173 = vpop.permute.xlu0 %172
    %174 = vrot.lane.b32.xlu0 %v125, 1
    %v175 = vpop.permute.xlu0 %174
    %vm176 = vcmp.lt.s32.totalorder %v132, 1
    %v177 = vsel %vm176, %v173, %v175
    %v178 = vsel %vm176, %v175, %v173
    %v181 = vcombine.low %v178, %v177
    %v183 = vmul.f32 %v171, %v181
    %v184 = vadd.f32 %v154, %v183
    %s185 = scalar_lea.vmem [#allocation2], 32
    %v186 = vld [vmem:[%s185] sm:$0xff]
    %v189 = vcombine.low %v124, %v125
    %v191 = vmul.f32 %v186, %v189
    %v192 = vadd.f32 %v169, %v191
    %s193 = scalar_lea.vmem [#allocation2], 40
    %v194 = vld [vmem:[%s193] sm:$0xff]
    %195 = vrot.lane.b32.xlu0 %v124, 127
    %v196 = vpop.permute.xlu0 %195
    %197 = vrot.lane.b32.xlu0 %v125, 127
    %v198 = vpop.permute.xlu0 %197
    %vm199 = vcmp.lt.s32.totalorder %v132, 127
    %v200 = vsel %vm199, %v196, %v198
    %v201 = vsel %vm199, %v198, %v196
    %v204 = vcombine.low %v200, %v201
    %v206 = vmul.f32 %v194, %v204
    %v207 = vadd.f32 %v184, %v206
    %s208 = scalar_lea.vmem [#allocation2], 48
    %v209 = vld [vmem:[%s208] sm:$0xff]
    %210 = vrot.lane.b32.xlu0 %v124, 113
    %v211 = vpop.permute.xlu0 %210
    %212 = vrot.lane.b32.xlu0 %v125, 113
    %v213 = vpop.permute.xlu0 %212
    %vm214 = vcmp.lt.s32.totalorder %v132, 113
    %v215 = vsel %vm214, %v211, %v213
    %v216 = vsel %vm214, %v213, %v211
    %v219 = vcombine.low %v215, %v216
    %v221 = vmul.f32 %v209, %v219
    %v222 = vadd.f32 %v192, %v221
    %s223 = scalar_lea.vmem [#allocation2], 56
    %v224 = vld [vmem:[%s223] sm:$0xff]
    %225 = vrot.lane.b32.xlu0 %v124, 112
    %v226 = vpop.permute.xlu0 %225
    %227 = vrot.lane.b32.xlu0 %v125, 112
    %v228 = vpop.permute.xlu0 %227
    %vm229 = vcmp.lt.s32.totalorder %v132, 112
    %v230 = vsel %vm229, %v226, %v228
    %v231 = vsel %vm229, %v228, %v226
    %v234 = vcombine.low %v230, %v231
    %v236 = vmul.f32 %v224, %v234
    %v237 = vadd.f32 %v207, %v236
    %s238 = scalar_lea.vmem [#allocation2], 64
    %v239 = vld [vmem:[%s238] sm:$0xff]
    %240 = vrot.lane.b32.xlu0 %v124, 111
    %v241 = vpop.permute.xlu0 %240
    %242 = vrot.lane.b32.xlu0 %v125, 111
    %v243 = vpop.permute.xlu0 %242
    %vm244 = vcmp.lt.s32.totalorder %v132, 111
    %v245 = vsel %vm244, %v241, %v243
    %v246 = vsel %vm244, %v243, %v241
    %v249 = vcombine.low %v245, %v246
    %v251 = vmul.f32 %v239, %v249
    %v252 = vadd.f32 %v222, %v251
    %v253 = vadd.f32 %v252, %v237
    %v255 = vrot.slane %v253, 6
    %v256 = vrot.slane %v255, 4
    %v258 = vadd.f32 %v253, %v256
    %v259 = vxor.u32 %v258, 2147483648
    %v260 = vmul.f32 %v259, 1.442695
    %v261 = vpow.pop %v260
    %v262 = vadd.f32 %v261, 1.0
    %v263 = vrcp.pop %v262
    %v264 = vmul.f32 1.0, %v263
    %v267 = vunpack.c.l.s4 1983009808
    %v268 = vunpack.c.0.s8 %v267
    %v269 = vlaneseq
    %v270 = vshrl.u32 %v269, 7
    %v271 = vsub.s32 %v268, %v270
    %v272 = vrot.slane %v264, %v271
    %274 = vst [vmem:[#allocation7] sm:$0xf] %v272
    // Predicated region
    $region18: #{tpu_custom_call.1} parent=1 // pred_check
      _
    $region19: #{tpu_custom_call.1} parent=1 // pred_check_branch
      %276 = sbr.rel (0) target = $region21
    $region20: #{tpu_custom_call.1} parent=1 // pred_region
      %s278 = ssub.s32 64, 64
      %279 = vsyncadd [#allocation4], %s278
      %s281 = sshll.u32 [#allocation7], 4
      %s282 = int_to_ptr.vmem [resolvable:$true] %s281
      %284 = dma.vmem_to_hbm [thread:$0]  %s282, 64, %s2, [#allocation4]
    $region21: #{tpu_custom_call.1} parent=1 // pred_fallthru
      _
    // Predicated region
    $region22: #{tpu_custom_call.1} parent=1 // pred_check
      _
    $region23: #{tpu_custom_call.1} parent=1 // pred_check_branch
      %286 = sbr.rel (0) target = $region25
    $region24: #{tpu_custom_call.1} parent=1 // pred_region
      %287 = dma.done [#allocation4], 64
    $region25: #{tpu_custom_call.1} parent=1 // pred_fallthru
      _
    %288 = vsyncpa [#allocation3], 1
    %289 = vsyncpa [#allocation6], 1
    %290 = vsyncpa [#allocation4], 1

</llo_original>
